<compile_context>
chip_gen: v5e
topology: v5e:2x2
jax: 0.10.0
libtpu: 0.0.40
codegen_flags: <defaults>
</compile_context>

<pallas_src>
import functools

import numpy as np

import jax
import jax.numpy as jnp
from jax import lax
from jax.experimental import pallas as pl
from jax.experimental.pallas import tpu as pltpu


def _resblock_kernel(x_ref, m1_ref, b1_ref, m2_ref, b2_ref, *rest,
                     img_rows, has_proj):
    """One block of images per grid step; all rows stacked along M.

    x_ref  : (M, W*Cin)          f32  M = block_batch * H image rows, channels in lanes
    m1_ref : (3, W*Cin, W*Cout)  f32  banded conv1 weights (one matrix per kernel row ky)
    b1_ref : (1, W*Cout)         f32  conv1 bias tiled per pixel
    m2_ref : (3, W*Cout, W*Cout) f32  banded conv2 weights
    b2_ref : (1, W*Cout)         f32
    [ms_ref: (W*Cin, W*Cout)     f32  banded 1x1 skip weights]   (only if has_proj)
    [bs_ref: (1, W*Cout)         f32]                            (only if has_proj)
    o_ref  : (M, W*Cout)         f32  lane-dense output rows
    """
    if has_proj:
        ms_ref, bs_ref, o_ref = rest
    else:
        (o_ref,) = rest

    m_rows, wcout = o_ref.shape
    x = x_ref[...]

    # Per-image boundary-row masks (computed once, reused by both convs).
    row = lax.broadcasted_iota(jnp.int32, (m_rows, wcout), 0) % img_rows
    top = row == 0                # first row of each image in the block
    bot = row == img_rows - 1     # last row of each image in the block

    def conv3x3_same(act, m_ref):
        # W taps / W 'same' padding are encoded in the banded matrices; the H taps
        # become row shifts of the per-tap products (shift commutes with right-matmul).
        p_above = jnp.dot(act, m_ref[0], preferred_element_type=jnp.float32)  # tap ky=0
        p_mid   = jnp.dot(act, m_ref[1], preferred_element_type=jnp.float32)  # tap ky=1
        p_below = jnp.dot(act, m_ref[2], preferred_element_type=jnp.float32)  # tap ky=2
        # out[r] += x[r-1] @ m[0]  -> shift product down one row, zero at image top.
        from_above = jnp.where(top, 0.0, pltpu.roll(p_above, shift=1, axis=0))
        # out[r] += x[r+1] @ m[2]  -> shift product up one row, zero at image bottom.
        from_below = jnp.where(bot, 0.0,
                               pltpu.roll(p_below, shift=m_rows - 1, axis=0))
        return p_mid + from_above + from_below                 # centre tap is the init

    h1 = jnp.maximum(conv3x3_same(x, m1_ref) + b1_ref[...], 0.0)   # conv1 + bias + ReLU
    h2 = conv3x3_same(h1, m2_ref) + b2_ref[...]                    # conv2 + bias

    if has_proj:
        skip = jnp.dot(x, ms_ref[...], preferred_element_type=jnp.float32) + bs_ref[...]
    else:
        skip = x                     # Cin == Cout: identity skip, exact f32 add

    o_ref[...] = jnp.maximum(h2 + skip, 0.0)    # lane-dense (M, W*Cout) store


def _banded_weights(w_oihw, width):
    """OIHW (Cout, Cin, 3, 3) conv weight -> (3, W*Cin, W*Cout) banded matrices (numpy).

    mats[ky][xin*Cin + ci, x*Cout + co] = w[co, ci, ky, xin - x + 1] (0 if |xin-x|>1),
    i.e. each matrix applies one kernel row to a channel-flattened image row and
    encodes 'same' padding along W.
    """
    w = np.asarray(w_oihw, np.float32)
    c_out, c_in, kh, kw = w.shape
    mats = np.zeros((kh, width * c_in, width * c_out), np.float32)
    for ky in range(kh):
        for kx in range(kw):
            shift = np.eye(width, width, k=1 - kx, dtype=np.float32)
            mats[ky] += np.kron(shift, w[:, :, ky, kx].T)
    return mats


def prepare_residual_block_params(params, *, width, in_channels, out_channels):
    """One-time (init-time, host-side) expansion of the conv weights into the
    lane-dense banded form consumed by the kernel.  Call once, reuse every forward."""
    prep = {
        "m1": jnp.asarray(_banded_weights(params["w1"], width)),
        "m2": jnp.asarray(_banded_weights(params["w2"], width)),
        "b1": jnp.asarray(np.tile(np.asarray(params["b1"], np.float32), width)[None, :]),
        "b2": jnp.asarray(np.tile(np.asarray(params["b2"], np.float32), width)[None, :]),
    }
    if in_channels != out_channels:
        ws_t = np.asarray(params["ws"], np.float32)[:, :, 0, 0].T        # (Cin, Cout)
        prep["ms"] = jnp.asarray(np.kron(np.eye(width, dtype=np.float32), ws_t))
        prep["bs"] = jnp.asarray(
            np.tile(np.asarray(params["bs"], np.float32), width)[None, :])
    return prep


@functools.partial(jax.jit,
                   static_argnames=("in_channels", "out_channels", "block_batch"))
def residual_block_pallas(x_nchw, prep, *, in_channels, out_channels, block_batch=None):
    """x_nchw: (N, Cin, H, W) float32.  Returns (N, Cout, H, W) float32."""
    N, Cin, H, W = x_nchw.shape
    assert Cin == in_channels
    Cout = out_channels
    has_proj = in_channels != out_channels
    wcin, wcout = W * Cin, W * Cout

    # Images per grid step: target M = B*H around 256 MXU rows, clamped to the batch.
    if block_batch is None:
        block_batch = max(1, min(N, max(1, 256 // max(H, 1))))
    B = min(block_batch, N)
    if B < N and (B * H) % 8 != 0:
        B = N                              # keep the M block sublane-aligned
    num_blocks = pl.cdiv(N, B)
    n_pad = num_blocks * B

    # NCHW -> rows with channels packed into lanes: (N*H, W*Cin).
    x_rows = jnp.transpose(x_nchw, (0, 2, 3, 1)).astype(jnp.float32)
    x_rows = x_rows.reshape(N, H, wcin)
    if n_pad != N:
        x_rows = jnp.concatenate(
            [x_rows, jnp.zeros((n_pad - N, H, wcin), x_rows.dtype)], axis=0)
    x_rows = x_rows.reshape(n_pad * H, wcin)

    operands = [x_rows, prep["m1"], prep["b1"], prep["m2"], prep["b2"]]
    in_specs = [
        pl.BlockSpec((B * H, wcin), lambda i: (i, 0)),
        pl.BlockSpec((3, wcin, wcout), lambda i: (0, 0, 0)),
        pl.BlockSpec((1, wcout), lambda i: (0, 0)),
        pl.BlockSpec((3, wcout, wcout), lambda i: (0, 0, 0)),
        pl.BlockSpec((1, wcout), lambda i: (0, 0)),
    ]
    if has_proj:
        operands += [prep["ms"], prep["bs"]]
        in_specs += [
            pl.BlockSpec((wcin, wcout), lambda i: (0, 0)),
            pl.BlockSpec((1, wcout), lambda i: (0, 0)),
        ]

    kernel = functools.partial(_resblock_kernel, img_rows=H, has_proj=has_proj)

    out_rows = pl.pallas_call(
        kernel,
        out_shape=jax.ShapeDtypeStruct((n_pad * H, wcout), jnp.float32),
        grid_spec=pltpu.PrefetchScalarGridSpec(
            num_scalar_prefetch=0,
            grid=(num_blocks,),
            in_specs=in_specs,
            out_specs=pl.BlockSpec((B * H, wcout), lambda i: (i, 0)),
        ),
        compiler_params=pltpu.CompilerParams(
            dimension_semantics=("parallel",),
        ),
    )(*operands)

    # (N*H, W*Cout) -> (N, H, W, Cout) -> NCHW
    out = out_rows[:N * H].reshape(N, H, W, Cout)
    return jnp.transpose(out, (0, 3, 1, 2))


def _reference_residual_block(x_nchw, params, in_channels, out_channels):
    """Pure-JAX reference mirroring the PyTorch module (NCHW / OIHW, f32)."""
    dn = ("NCHW", "OIHW", "NCHW")

    def conv(x, w, b, pad):
        y = lax.conv_general_dilated(x, w, window_strides=(1, 1),
                                     padding=[(pad, pad), (pad, pad)],
                                     dimension_numbers=dn)
        return y + b.reshape(1, -1, 1, 1)

    if in_channels != out_channels:
        identity = conv(x_nchw, params["ws"], params["bs"], pad=0)
    else:
        identity = x_nchw
    out = jnp.maximum(conv(x_nchw, params["w1"], params["b1"], pad=1), 0.0)
    out = conv(out, params["w2"], params["b2"], pad=1)
    return jnp.maximum(out + identity, 0.0)


if __name__ == "__main__":
    def make_params(key, cin, cout, with_proj):
        ks = jax.random.split(key, 6)
        p = {
            "w1": 0.1 * jax.random.normal(ks[0], (cout, cin, 3, 3), jnp.float32),
            "b1": 0.1 * jax.random.normal(ks[1], (cout,), jnp.float32),
            "w2": 0.1 * jax.random.normal(ks[2], (cout, cout, 3, 3), jnp.float32),
            "b2": 0.1 * jax.random.normal(ks[3], (cout,), jnp.float32),
        }
        if with_proj:
            p["ws"] = 0.1 * jax.random.normal(ks[4], (cout, cin, 1, 1), jnp.float32)
            p["bs"] = 0.1 * jax.random.normal(ks[5], (cout,), jnp.float32)
        return p

    key = jax.random.PRNGKey(0)
    k1, k2, k3, k4 = jax.random.split(key, 4)
    N, H, W = 2, 16, 16
    TOL = 2e-2   # f32 storage; only hardware-default matmul rounding differs from ref

    # Case 1: in_channels != out_channels  -> 1x1 projection skip path.
    cin, cout = 4, 8
    x = jax.random.normal(k1, (N, cin, H, W), jnp.float32)
    p = make_params(k2, cin, cout, with_proj=True)
    prep = prepare_residual_block_params(p, width=W, in_channels=cin, out_channels=cout)
    out = jax.block_until_ready(
        residual_block_pallas(x, prep, in_channels=cin, out_channels=cout))
    ref = _reference_residual_block(x, p, cin, cout)
    assert out.shape == (N, cout, H, W), out.shape
    assert jnp.allclose(out, ref, atol=TOL, rtol=TOL), float(jnp.max(jnp.abs(out - ref)))

    # Case 2: in_channels == out_channels -> identity skip (no projection matmul).
    cin = cout = 8
    x = jax.random.normal(k3, (N, cin, H, W), jnp.float32)
    p = make_params(k4, cin, cout, with_proj=False)
    prep = prepare_residual_block_params(p, width=W, in_channels=cin, out_channels=cout)
    out = jax.block_until_ready(
        residual_block_pallas(x, prep, in_channels=cin, out_channels=cout))
    ref = _reference_residual_block(x, p, cin, cout)
    assert out.shape == (N, cout, H, W), out.shape
    assert jnp.allclose(out, ref, atol=TOL, rtol=TOL), float(jnp.max(jnp.abs(out - ref)))

    print("KERNEL_OK")
</pallas_src>

<mosaic_0001>
module attributes {stable_mosaic.version = 11 : i64} {
  func.func @_resblock_kernel(%arg0: i32, %arg1: memref<32x64xf32, #tpu.memory_space<vmem>>, %arg2: memref<3x64x128xf32, #tpu.memory_space<vmem>>, %arg3: memref<1x128xf32, #tpu.memory_space<vmem>>, %arg4: memref<3x128x128xf32, #tpu.memory_space<vmem>>, %arg5: memref<1x128xf32, #tpu.memory_space<vmem>>, %arg6: memref<64x128xf32, #tpu.memory_space<vmem>>, %arg7: memref<1x128xf32, #tpu.memory_space<vmem>>, %arg8: memref<32x128xf32, #tpu.memory_space<vmem>>) attributes {dimension_semantics = [#tpu.dimension_semantics<parallel>], iteration_bounds = array<i64: 1>, scalar_prefetch = 0 : i64, scratch_operands = 0 : i64, tpu.core_type = #tpu.core_type<tc>, window_params = [{transform_indices = @transform_0, window_bounds = array<i64: 32, 64>}, {pipeline_mode = #tpu.pipeline_mode<synchronous>, transform_indices = @transform_1, window_bounds = array<i64: 3, 64, 128>}, {pipeline_mode = #tpu.pipeline_mode<synchronous>, transform_indices = @transform_2, window_bounds = array<i64: 1, 128>}, {pipeline_mode = #tpu.pipeline_mode<synchronous>, transform_indices = @transform_3, window_bounds = array<i64: 3, 128, 128>}, {pipeline_mode = #tpu.pipeline_mode<synchronous>, transform_indices = @transform_4, window_bounds = array<i64: 1, 128>}, {pipeline_mode = #tpu.pipeline_mode<synchronous>, transform_indices = @transform_5, window_bounds = array<i64: 64, 128>}, {pipeline_mode = #tpu.pipeline_mode<synchronous>, transform_indices = @transform_6, window_bounds = array<i64: 1, 128>}, {transform_indices = @transform_7, window_bounds = array<i64: 32, 128>}]} {
    %c0 = arith.constant 0 : index
    %c0_0 = arith.constant 0 : index
    %0 = vector.load %arg1[%c0, %c0_0] : memref<32x64xf32, #tpu.memory_space<vmem>>, vector<32x64xf32>
    %1 = tpu.iota {dimensions = array<i32: 0>} : vector<32x128xi32>
    %c16_i32 = arith.constant 16 : i32
    %c0_i32 = arith.constant 0 : i32
    %2 = arith.cmpi eq, %c16_i32, %c0_i32 : i32
    %c1_i32 = arith.constant 1 : i32
    %3 = arith.select %2, %c1_i32, %c16_i32 : i32
    %4 = vector.broadcast %3 : i32 to vector<32x128xi32>
    %5 = arith.remsi %1, %4 : vector<32x128xi32>
    %c0_i32_1 = arith.constant 0 : i32
    %6 = vector.broadcast %c0_i32_1 : i32 to vector<32x128xi32>
    %7 = arith.cmpi ne, %5, %6 : vector<32x128xi32>
    %c0_i32_2 = arith.constant 0 : i32
    %8 = vector.broadcast %c0_i32_2 : i32 to vector<32x128xi32>
    %9 = arith.cmpi slt, %5, %8 : vector<32x128xi32>
    %c0_i32_3 = arith.constant 0 : i32
    %10 = arith.cmpi slt, %3, %c0_i32_3 : i32
    %11 = vector.broadcast %10 : i1 to vector<32x128xi1>
    %12 = vector.broadcast %11 : vector<32x128xi1> to vector<32x128xi1>
    %13 = arith.xori %9, %12 : vector<32x128xi1>
    %14 = arith.andi %13, %7 : vector<32x128xi1>
    %15 = vector.broadcast %3 : i32 to vector<32x128xi32>
    %16 = arith.addi %5, %15 : vector<32x128xi32>
    %17 = arith.select %14, %16, %5 : vector<32x128xi1>, vector<32x128xi32>
    %c0_i32_4 = arith.constant 0 : i32
    %18 = vector.broadcast %c0_i32_4 : i32 to vector<32x128xi32>
    %19 = arith.cmpi eq, %17, %18 : vector<32x128xi32>
    %c15_i32 = arith.constant 15 : i32
    %20 = vector.broadcast %c15_i32 : i32 to vector<32x128xi32>
    %21 = arith.cmpi eq, %17, %20 : vector<32x128xi32>
    %c0_5 = arith.constant 0 : index
    %c0_6 = arith.constant 0 : index
    %c0_7 = arith.constant 0 : index
    %22 = vector.load %arg2[%c0_5, %c0_6, %c0_7] : memref<3x64x128xf32, #tpu.memory_space<vmem>>, vector<1x64x128xf32>
    %23 = vector.shape_cast %22 : vector<1x64x128xf32> to vector<64x128xf32>
    %cst = arith.constant dense<0.000000e+00> : vector<32x128xf32>
    %24 = tpu.matmul %0, %23, %cst {dimension_numbers = #tpu.dot_dimension_numbers<[1], [0], [0], [1], [0, 0, 1, 1], [], []>} : vector<32x64xf32>, vector<64x128xf32>, vector<32x128xf32> -> vector<32x128xf32>
    %c1 = arith.constant 1 : index
    %c0_8 = arith.constant 0 : index
    %c0_9 = arith.constant 0 : index
    %25 = vector.load %arg2[%c1, %c0_8, %c0_9] : memref<3x64x128xf32, #tpu.memory_space<vmem>>, vector<1x64x128xf32>
    %26 = vector.shape_cast %25 : vector<1x64x128xf32> to vector<64x128xf32>
    %cst_10 = arith.constant dense<0.000000e+00> : vector<32x128xf32>
    %27 = tpu.matmul %0, %26, %cst_10 {dimension_numbers = #tpu.dot_dimension_numbers<[1], [0], [0], [1], [0, 0, 1, 1], [], []>} : vector<32x64xf32>, vector<64x128xf32>, vector<32x128xf32> -> vector<32x128xf32>
    %c2 = arith.constant 2 : index
    %c0_11 = arith.constant 0 : index
    %c0_12 = arith.constant 0 : index
    %28 = vector.load %arg2[%c2, %c0_11, %c0_12] : memref<3x64x128xf32, #tpu.memory_space<vmem>>, vector<1x64x128xf32>
    %29 = vector.shape_cast %28 : vector<1x64x128xf32> to vector<64x128xf32>
    %cst_13 = arith.constant dense<0.000000e+00> : vector<32x128xf32>
    %30 = tpu.matmul %0, %29, %cst_13 {dimension_numbers = #tpu.dot_dimension_numbers<[1], [0], [0], [1], [0, 0, 1, 1], [], []>} : vector<32x64xf32>, vector<64x128xf32>, vector<32x128xf32> -> vector<32x128xf32>
    %c1_i32_14 = arith.constant 1 : i32
    %31 = tpu.dynamic_rotate %24 by %c1_i32_14 dim 0 : vector<32x128xf32>, i32 -> vector<32x128xf32>
    %cst_15 = arith.constant 0.000000e+00 : f32
    %32 = vector.broadcast %cst_15 : f32 to vector<32x128xf32>
    %33 = arith.select %19, %32, %31 : vector<32x128xi1>, vector<32x128xf32>
    %c31_i32 = arith.constant 31 : i32
    %34 = tpu.dynamic_rotate %30 by %c31_i32 dim 0 : vector<32x128xf32>, i32 -> vector<32x128xf32>
    %cst_16 = arith.constant 0.000000e+00 : f32
    %35 = vector.broadcast %cst_16 : f32 to vector<32x128xf32>
    %36 = arith.select %21, %35, %34 : vector<32x128xi1>, vector<32x128xf32>
    %37 = arith.addf %27, %33 : vector<32x128xf32>
    %38 = arith.addf %37, %36 : vector<32x128xf32>
    %c0_17 = arith.constant 0 : index
    %c0_18 = arith.constant 0 : index
    %39 = vector.load %arg3[%c0_17, %c0_18] : memref<1x128xf32, #tpu.memory_space<vmem>>, vector<1x128xf32>
    %40 = vector.broadcast %39 : vector<1x128xf32> to vector<32x128xf32>
    %41 = arith.addf %38, %40 : vector<32x128xf32>
    %cst_19 = arith.constant 0.000000e+00 : f32
    %42 = vector.broadcast %cst_19 : f32 to vector<32x128xf32>
    %43 = arith.maximumf %41, %42 : vector<32x128xf32>
    %c0_20 = arith.constant 0 : index
    %c0_21 = arith.constant 0 : index
    %c0_22 = arith.constant 0 : index
    %44 = vector.load %arg4[%c0_20, %c0_21, %c0_22] : memref<3x128x128xf32, #tpu.memory_space<vmem>>, vector<1x128x128xf32>
    %45 = vector.shape_cast %44 : vector<1x128x128xf32> to vector<128x128xf32>
    %cst_23 = arith.constant dense<0.000000e+00> : vector<32x128xf32>
    %46 = tpu.matmul %43, %45, %cst_23 {dimension_numbers = #tpu.dot_dimension_numbers<[1], [0], [0], [1], [0, 0, 1, 1], [], []>} : vector<32x128xf32>, vector<128x128xf32>, vector<32x128xf32> -> vector<32x128xf32>
    %c1_24 = arith.constant 1 : index
    %c0_25 = arith.constant 0 : index
    %c0_26 = arith.constant 0 : index
    %47 = vector.load %arg4[%c1_24, %c0_25, %c0_26] : memref<3x128x128xf32, #tpu.memory_space<vmem>>, vector<1x128x128xf32>
    %48 = vector.shape_cast %47 : vector<1x128x128xf32> to vector<128x128xf32>
    %cst_27 = arith.constant dense<0.000000e+00> : vector<32x128xf32>
    %49 = tpu.matmul %43, %48, %cst_27 {dimension_numbers = #tpu.dot_dimension_numbers<[1], [0], [0], [1], [0, 0, 1, 1], [], []>} : vector<32x128xf32>, vector<128x128xf32>, vector<32x128xf32> -> vector<32x128xf32>
    %c2_28 = arith.constant 2 : index
    %c0_29 = arith.constant 0 : index
    %c0_30 = arith.constant 0 : index
    %50 = vector.load %arg4[%c2_28, %c0_29, %c0_30] : memref<3x128x128xf32, #tpu.memory_space<vmem>>, vector<1x128x128xf32>
    %51 = vector.shape_cast %50 : vector<1x128x128xf32> to vector<128x128xf32>
    %cst_31 = arith.constant dense<0.000000e+00> : vector<32x128xf32>
    %52 = tpu.matmul %43, %51, %cst_31 {dimension_numbers = #tpu.dot_dimension_numbers<[1], [0], [0], [1], [0, 0, 1, 1], [], []>} : vector<32x128xf32>, vector<128x128xf32>, vector<32x128xf32> -> vector<32x128xf32>
    %c1_i32_32 = arith.constant 1 : i32
    %53 = tpu.dynamic_rotate %46 by %c1_i32_32 dim 0 : vector<32x128xf32>, i32 -> vector<32x128xf32>
    %cst_33 = arith.constant 0.000000e+00 : f32
    %54 = vector.broadcast %cst_33 : f32 to vector<32x128xf32>
    %55 = arith.select %19, %54, %53 : vector<32x128xi1>, vector<32x128xf32>
    %c31_i32_34 = arith.constant 31 : i32
    %56 = tpu.dynamic_rotate %52 by %c31_i32_34 dim 0 : vector<32x128xf32>, i32 -> vector<32x128xf32>
    %cst_35 = arith.constant 0.000000e+00 : f32
    %57 = vector.broadcast %cst_35 : f32 to vector<32x128xf32>
    %58 = arith.select %21, %57, %56 : vector<32x128xi1>, vector<32x128xf32>
    %59 = arith.addf %49, %55 : vector<32x128xf32>
    %60 = arith.addf %59, %58 : vector<32x128xf32>
    %c0_36 = arith.constant 0 : index
    %c0_37 = arith.constant 0 : index
    %61 = vector.load %arg5[%c0_36, %c0_37] : memref<1x128xf32, #tpu.memory_space<vmem>>, vector<1x128xf32>
    %62 = vector.broadcast %61 : vector<1x128xf32> to vector<32x128xf32>
    %63 = arith.addf %60, %62 : vector<32x128xf32>
    %c0_38 = arith.constant 0 : index
    %c0_39 = arith.constant 0 : index
    %64 = vector.load %arg6[%c0_38, %c0_39] : memref<64x128xf32, #tpu.memory_space<vmem>>, vector<64x128xf32>
    %cst_40 = arith.constant dense<0.000000e+00> : vector<32x128xf32>
    %65 = tpu.matmul %0, %64, %cst_40 {dimension_numbers = #tpu.dot_dimension_numbers<[1], [0], [0], [1], [0, 0, 1, 1], [], []>} : vector<32x64xf32>, vector<64x128xf32>, vector<32x128xf32> -> vector<32x128xf32>
    %c0_41 = arith.constant 0 : index
    %c0_42 = arith.constant 0 : index
    %66 = vector.load %arg7[%c0_41, %c0_42] : memref<1x128xf32, #tpu.memory_space<vmem>>, vector<1x128xf32>
    %67 = vector.broadcast %66 : vector<1x128xf32> to vector<32x128xf32>
    %68 = arith.addf %65, %67 : vector<32x128xf32>
    %69 = arith.addf %63, %68 : vector<32x128xf32>
    %cst_43 = arith.constant 0.000000e+00 : f32
    %70 = vector.broadcast %cst_43 : f32 to vector<32x128xf32>
    %71 = arith.maximumf %69, %70 : vector<32x128xf32>
    %c0_44 = arith.constant 0 : index
    %c0_45 = arith.constant 0 : index
    %72 = vector.load %arg8[%c0_44, %c0_45] : memref<32x128xf32, #tpu.memory_space<vmem>>, vector<32x128xf32>
    tpu.vector_store %arg8[%c0_44, %c0_45], %71 {strides = array<i32>} : memref<32x128xf32, #tpu.memory_space<vmem>>, vector<32x128xf32>,
    return
  }
  func.func @transform_0(%arg0: i32) -> (i32, i32) {
    %c0_i32 = arith.constant 0 : i32
    %c0_i32_0 = arith.constant 0 : i32
    return %arg0, %c0_i32 : i32, i32
  }
  func.func @transform_1(%arg0: i32) -> (i32, i32, i32) {
    %c0_i32 = arith.constant 0 : i32
    %c0_i32_0 = arith.constant 0 : i32
    %c0_i32_1 = arith.constant 0 : i32
    %c0_i32_2 = arith.constant 0 : i32
    return %c0_i32, %c0_i32_0, %c0_i32_1 : i32, i32, i32
  }
  func.func @transform_2(%arg0: i32) -> (i32, i32) {
    %c0_i32 = arith.constant 0 : i32
    %c0_i32_0 = arith.constant 0 : i32
    %c0_i32_1 = arith.constant 0 : i32
    return %c0_i32, %c0_i32_0 : i32, i32
  }
  func.func @transform_3(%arg0: i32) -> (i32, i32, i32) {
    %c0_i32 = arith.constant 0 : i32
    %c0_i32_0 = arith.constant 0 : i32
    %c0_i32_1 = arith.constant 0 : i32
    %c0_i32_2 = arith.constant 0 : i32
    return %c0_i32, %c0_i32_0, %c0_i32_1 : i32, i32, i32
  }
  func.func @transform_4(%arg0: i32) -> (i32, i32) {
    %c0_i32 = arith.constant 0 : i32
    %c0_i32_0 = arith.constant 0 : i32
    %c0_i32_1 = arith.constant 0 : i32
    return %c0_i32, %c0_i32_0 : i32, i32
  }
  func.func @transform_5(%arg0: i32) -> (i32, i32) {
    %c0_i32 = arith.constant 0 : i32
    %c0_i32_0 = arith.constant 0 : i32
    %c0_i32_1 = arith.constant 0 : i32
    return %c0_i32, %c0_i32_0 : i32, i32
  }
  func.func @transform_6(%arg0: i32) -> (i32, i32) {
    %c0_i32 = arith.constant 0 : i32
    %c0_i32_0 = arith.constant 0 : i32
    %c0_i32_1 = arith.constant 0 : i32
    return %c0_i32, %c0_i32_0 : i32, i32
  }
  func.func @transform_7(%arg0: i32) -> (i32, i32) {
    %c0_i32 = arith.constant 0 : i32
    %c0_i32_0 = arith.constant 0 : i32
    return %arg0, %c0_i32 : i32, i32
  }
}

</mosaic_0001>

<llo_original>
// kernel: residual_block_pallas.1
$region0: #{residual_block_pallas.1}
  #allocation0 [shape = 'u32[]', space=smem, size = 0x4, offset = 0x4, fixed_abs, tag = 'smem constant byte address 0x4 - core index']
  #allocation1 [shape = 'u32[72,128]{1,0:T(1,128)}', space=vmem, size = 0x9000, scoped, tag = 'internal scratch']
  %s0 = inlined_call_operand.vmem [shape: f32[32,64], index: 0, kind: input, shape index: {}]
  %s1 = inlined_call_operand.hbm [shape: f32[3,64,128], index: 1, kind: input, shape index: {}]
  %s2 = inlined_call_operand.vmem [shape: f32[1,128], index: 2, kind: input, shape index: {}]
  %s3 = inlined_call_operand.vmem [shape: f32[3,128,128], index: 3, kind: input, shape index: {}]
  %s4 = inlined_call_operand.vmem [shape: f32[1,128], index: 4, kind: input, shape index: {}]
  %s5 = inlined_call_operand.vmem [shape: f32[64,128], index: 5, kind: input, shape index: {}]
  %s6 = inlined_call_operand.vmem [shape: f32[1,128], index: 6, kind: input, shape index: {}]
  %s7 = inlined_call_operand.vmem [shape: f32[32,128], index: 7, kind: output, shape index: {}]
  %s8 = sld [smem:[#allocation0]]
  $region42: #{residual_block_pallas.1} parent=0
    _
  %s10 = ssub.s32 1, %s8
  %s11 = scalar_select 0, %s10, %s8
  $region1: #{residual_block_pallas.1} parent=0
    #allocation2 [shape = 'u8[98304]{0}', space=vmem, size = 0x18000, scoped, tag = 'input window, operand 1, single buffered']
    #allocation3 [shape = 's32[1]{0}', space=sflag, size = 0x4, scoped, tag = 'scoped memory for residual_block_pallas.1']
    %12 = vsyncpa [#allocation3], 0
    // Predicated region
    $region2: #{residual_block_pallas.1} parent=1 // pred_check
      _
    $region3: #{residual_block_pallas.1} parent=1 // pred_check_branch
      %14 = sbr.rel (0) target = $region5
    $region4: #{residual_block_pallas.1} parent=1 // pred_region
      _
    $region5: #{residual_block_pallas.1} parent=1 // pred_fallthru
      _
    // Predicated region
    $region6: #{residual_block_pallas.1} parent=1 // pred_check
      _
    $region7: #{residual_block_pallas.1} parent=1 // pred_check_branch
      %16 = sbr.rel (0) target = $region9
    $region8: #{residual_block_pallas.1} parent=1 // pred_region
      %18 = vsyncadd [#allocation3], 0
      %s19 = sshll.u32 %s1, 4
      %s20 = int_to_ptr.hbm [resolvable:$true] %s19
      %s21 = sshll.u32 [#allocation2], 4
      %s22 = int_to_ptr.vmem [resolvable:$true] %s21
      %27 = dma.hbm_to_vmem [thread:$0]  %s20, 3072, %s22, [#allocation3], 128, 128, 8
    $region9: #{residual_block_pallas.1} parent=1 // pred_fallthru
      _
    // Predicated region
    $region10: #{residual_block_pallas.1} parent=1 // pred_check
      _
    $region11: #{residual_block_pallas.1} parent=1 // pred_check_branch
      %29 = sbr.rel (0) target = $region13
    $region12: #{residual_block_pallas.1} parent=1 // pred_region
      _
    $region13: #{residual_block_pallas.1} parent=1 // pred_fallthru
      _
    // Predicated region
    $region14: #{residual_block_pallas.1} parent=1 // pred_check
      _
    $region15: #{residual_block_pallas.1} parent=1 // pred_check_branch
      %31 = sbr.rel (0) target = $region17
    $region16: #{residual_block_pallas.1} parent=1 // pred_region
      _
    $region17: #{residual_block_pallas.1} parent=1 // pred_fallthru
      _
    // Predicated region
    $region18: #{residual_block_pallas.1} parent=1 // pred_check
      _
    $region19: #{residual_block_pallas.1} parent=1 // pred_check_branch
      %33 = sbr.rel (0) target = $region21
    $region20: #{residual_block_pallas.1} parent=1 // pred_region
      _
    $region21: #{residual_block_pallas.1} parent=1 // pred_fallthru
      _
    // Predicated region
    $region22: #{residual_block_pallas.1} parent=1 // pred_check
      _
    $region23: #{residual_block_pallas.1} parent=1 // pred_check_branch
      %35 = sbr.rel (0) target = $region25
    $region24: #{residual_block_pallas.1} parent=1 // pred_region
      _
    $region25: #{residual_block_pallas.1} parent=1 // pred_fallthru
      _
    // Predicated region
    $region26: #{residual_block_pallas.1} parent=1 // pred_check
      _
    $region27: #{residual_block_pallas.1} parent=1 // pred_check_branch
      %37 = sbr.rel (0) target = $region29
    $region28: #{residual_block_pallas.1} parent=1 // pred_region
      _
    $region29: #{residual_block_pallas.1} parent=1 // pred_fallthru
      _
    // Predicated region
    $region30: #{residual_block_pallas.1} parent=1 // pred_check
      _
    $region31: #{residual_block_pallas.1} parent=1 // pred_check_branch
      %39 = sbr.rel (0) target = $region33
    $region32: #{residual_block_pallas.1} parent=1 // pred_region
      %41 = dma.done [#allocation3], 3072
    $region33: #{residual_block_pallas.1} parent=1 // pred_fallthru
      _
    %v42 = vld [vmem:[%s0] sm:$0xff]
    %v43 = vld [vmem:[%s0 + $0x8] sm:$0xff]
    %v44 = vld [vmem:[%s0 + $0x10] sm:$0xff]
    %v45 = vld [vmem:[%s0 + $0x18] sm:$0xff]
    %v46 = vlaneseq
    %v47 = vshrl.u32 %v46, 7
    %v48 = vadd.s32 %v47, 8
    %v49 = vadd.s32 %v47, 16
    %v50 = vadd.s32 %v47, 24
    %vm51 = vcmp.lt.s32.totalorder %v47, 0
    %v52 = vsub.s32 0, %v47
    %v53 = vsel %vm51, %v52, %v47
    %v54 = vshrl.u32 %v53, 4
    %v55 = vand.u32 %v53, 15
    %v56 = vsub.s32 0, %v55
    %v57 = vsel %vm51, %v56, %v55
    %vm58 = vcmp.lt.s32.totalorder %v48, 0
    %v59 = vsub.s32 0, %v48
    %v60 = vsel %vm58, %v59, %v48
    %v61 = vshrl.u32 %v60, 4
    %v62 = vand.u32 %v60, 15
    %v63 = vsub.s32 0, %v62
    %v64 = vsel %vm58, %v63, %v62
    %vm65 = vcmp.lt.s32.totalorder %v49, 0
    %v66 = vsub.s32 0, %v49
    %v67 = vsel %vm65, %v66, %v49
    %v68 = vshrl.u32 %v67, 4
    %v69 = vand.u32 %v67, 15
    %v70 = vsub.s32 0, %v69
    %v71 = vsel %vm65, %v70, %v69
    %vm72 = vcmp.lt.s32.totalorder %v50, 0
    %v73 = vsub.s32 0, %v50
    %v74 = vsel %vm72, %v73, %v50
    %v75 = vshrl.u32 %v74, 4
    %v76 = vand.u32 %v74, 15
    %v77 = vsub.s32 0, %v76
    %v78 = vsel %vm72, %v77, %v76
    %vm79 = vcmp.ne.s32.totalorder %v57, 0
    %vm80 = vcmp.ne.s32.totalorder %v64, 0
    %vm81 = vcmp.ne.s32.totalorder %v71, 0
    %vm82 = vcmp.ne.s32.totalorder %v78, 0
    %vm83 = vcmp.lt.s32.totalorder %v57, 0
    %vm84 = vcmp.lt.s32.totalorder %v64, 0
    %vm85 = vcmp.lt.s32.totalorder %v71, 0
    %vm86 = vcmp.lt.s32.totalorder %v78, 0
    %vm87 = vmand %vm83, %vm79
    %vm88 = vmand %vm84, %vm80
    %vm89 = vmand %vm85, %vm81
    %vm90 = vmand %vm86, %vm82
    %v91 = vadd.s32 %v57, 16
    %v92 = vadd.s32 %v64, 16
    %v93 = vadd.s32 %v71, 16
    %v94 = vadd.s32 %v78, 16
    %v95 = vsel %vm87, %v91, %v57
    %v96 = vsel %vm88, %v92, %v64
    %v97 = vsel %vm89, %v93, %v71
    %v98 = vsel %vm90, %v94, %v78
    %vm99 = vcmp.eq.s32.totalorder %v95, 0
    %vm100 = vcmp.eq.s32.totalorder %v96, 0
    %vm101 = vcmp.eq.s32.totalorder %v97, 0
    %vm102 = vcmp.eq.s32.totalorder %v98, 0
    %vm103 = vcmp.eq.s32.totalorder %v95, 15
    %vm104 = vcmp.eq.s32.totalorder %v96, 15
    %vm105 = vcmp.eq.s32.totalorder %v97, 15
    %vm106 = vcmp.eq.s32.totalorder %v98, 15
    %v107 = vld [vmem:[#allocation2] sm:$0xff]
    %v108 = vld [vmem:[#allocation2 + $0x8] sm:$0xff]
    %v109 = vld [vmem:[#allocation2 + $0x10] sm:$0xff]
    %v110 = vld [vmem:[#allocation2 + $0x18] sm:$0xff]
    %v111 = vld [vmem:[#allocation2 + $0x20] sm:$0xff]
    %v112 = vld [vmem:[#allocation2 + $0x28] sm:$0xff]
    %v113 = vld [vmem:[#allocation2 + $0x30] sm:$0xff]
    %v114 = vld [vmem:[#allocation2 + $0x38] sm:$0xff]
    %vm115 = vcmask 523264
    %v117 = vsel %vm115, %v42, 0
    %v120 = vsel %vm115, %v43, 0
    %v123 = vsel %vm115, %v44, 0
    %v126 = vsel %vm115, %v45, 0
    %128 = vmatpush.msra.mxu0 0.0
    %129 = vmatpush.msra.mxu0 0.0
    %130 = vmatpush.msra.mxu0 0.0
    %131 = vmatpush.msra.mxu0 0.0
    %132 = vmatpush.msra.mxu0 0.0
    %133 = vmatpush.msra.mxu0 0.0
    %134 = vmatpush.msra.mxu0 0.0
    %135 = vmatpush.msra.mxu0 0.0
    %136 = vmatpush.msra.mxu0 %v114
    %137 = vmatpush.msra.mxu0 %v113
    %138 = vmatpush.msra.mxu0 %v112
    %139 = vmatpush.msra.mxu0 %v111
    %140 = vmatpush.msra.mxu0 %v110
    %141 = vmatpush.msra.mxu0 %v109
    %142 = vmatpush.msra.mxu0 %v108
    %143 = vmatpush.msra.mxu0 %v107
    %144 = vmatmul.f32.gmra.mxu0 %v117
    %v145 = vpop.f32.mrf.mxu0
    %v146 = vadd.f32 0.0, %v145
    %147 = vmatmul.f32.gmra.mxu0 %v120
    %v148 = vpop.f32.mrf.mxu0
    %v149 = vadd.f32 0.0, %v148
    %150 = vmatmul.f32.gmra.mxu0 %v123
    %v151 = vpop.f32.mrf.mxu0
    %v152 = vadd.f32 0.0, %v151
    %153 = vmatmul.f32.gmra.mxu0 %v126
    %v154 = vpop.f32.mrf.mxu0
    %v155 = vadd.f32 0.0, %v154
    %156 = vdwg.mxu0
    %s157 = scalar_lea.vmem [#allocation2], 64
    %v158 = vld [vmem:[%s157] sm:$0xff]
    %v159 = vld [vmem:[%s157 + $0x8] sm:$0xff]
    %v160 = vld [vmem:[%s157 + $0x10] sm:$0xff]
    %v161 = vld [vmem:[%s157 + $0x18] sm:$0xff]
    %v162 = vld [vmem:[%s157 + $0x20] sm:$0xff]
    %v163 = vld [vmem:[%s157 + $0x28] sm:$0xff]
    %v164 = vld [vmem:[%s157 + $0x30] sm:$0xff]
    %v165 = vld [vmem:[%s157 + $0x38] sm:$0xff]
    %s166 = scalar_lea.vmem [#allocation2], 128
    %v167 = vld [vmem:[%s166] sm:$0xff]
    %v168 = vld [vmem:[%s166 + $0x8] sm:$0xff]
    %v169 = vld [vmem:[%s166 + $0x10] sm:$0xff]
    %v170 = vld [vmem:[%s166 + $0x18] sm:$0xff]
    %v171 = vld [vmem:[%s166 + $0x20] sm:$0xff]
    %v172 = vld [vmem:[%s166 + $0x28] sm:$0xff]
    %v173 = vld [vmem:[%s166 + $0x30] sm:$0xff]
    %v174 = vld [vmem:[%s166 + $0x38] sm:$0xff]
    %175 = vmatpush.msra.mxu0 0.0
    %176 = vmatpush.msra.mxu0 0.0
    %177 = vmatpush.msra.mxu0 0.0
    %178 = vmatpush.msra.mxu0 0.0
    %179 = vmatpush.msra.mxu0 0.0
    %180 = vmatpush.msra.mxu0 0.0
    %181 = vmatpush.msra.mxu0 0.0
    %182 = vmatpush.msra.mxu0 0.0
    %183 = vmatpush.msra.mxu0 %v174
    %184 = vmatpush.msra.mxu0 %v173
    %185 = vmatpush.msra.mxu0 %v172
    %186 = vmatpush.msra.mxu0 %v171
    %187 = vmatpush.msra.mxu0 %v170
    %188 = vmatpush.msra.mxu0 %v169
    %189 = vmatpush.msra.mxu0 %v168
    %190 = vmatpush.msra.mxu0 %v167
    %191 = vmatmul.f32.gmra.mxu0 %v117
    %v192 = vpop.f32.mrf.mxu0
    %v193 = vadd.f32 0.0, %v192
    %194 = vmatmul.f32.gmra.mxu0 %v120
    %v195 = vpop.f32.mrf.mxu0
    %v196 = vadd.f32 0.0, %v195
    %197 = vmatmul.f32.gmra.mxu0 %v123
    %v198 = vpop.f32.mrf.mxu0
    %v199 = vadd.f32 0.0, %v198
    %200 = vmatmul.f32.gmra.mxu0 %v126
    %v201 = vpop.f32.mrf.mxu0
    %v202 = vadd.f32 0.0, %v201
    %203 = vdwg.mxu0
    %v204 = vrot.slane %v146, 7
    %v205 = vrot.slane %v149, 7
    %v206 = vrot.slane %v152, 7
    %v207 = vrot.slane %v155, 7
    %vm208 = vcmp.lt.s32.totalorder %v47, 1
    %v209 = vsel %vm208, %v206, %v207
    %v210 = vsel %vm208, %v205, %v206
    %v211 = vsel %vm208, %v204, %v205
    %v212 = vsel %vm208, %v207, %v204
    %v213 = vsel %vm99, 0.0, %v212
    %v214 = vsel %vm100, 0.0, %v211
    %v215 = vsel %vm101, 0.0, %v210
    %v216 = vsel %vm102, 0.0, %v209
    %v217 = vrot.slane %v193, 1
    %v218 = vrot.slane %v196, 1
    %v219 = vrot.slane %v199, 1
    %v220 = vrot.slane %v202, 1
    %vm221 = vcmp.lt.s32.totalorder %v47, 7
    %v222 = vsel %vm221, %v219, %v220
    %v223 = vsel %vm221, %v218, %v219
    %v224 = vsel %vm221, %v217, %v218
    %v225 = vsel %vm221, %v220, %v217
    %v226 = vsel %vm103, 0.0, %v224
    %v227 = vsel %vm104, 0.0, %v223
    %v228 = vsel %vm105, 0.0, %v222
    %v229 = vsel %vm106, 0.0, %v225
    %230 = vmatpush.msra.mxu0 0.0
    %231 = vmatpush.msra.mxu0 0.0
    %232 = vmatpush.msra.mxu0 0.0
    %233 = vmatpush.msra.mxu0 0.0
    %234 = vmatpush.msra.mxu0 0.0
    %235 = vmatpush.msra.mxu0 0.0
    %236 = vmatpush.msra.mxu0 0.0
    %237 = vmatpush.msra.mxu0 0.0
    %238 = vmatpush.msra.mxu0 %v165
    %239 = vmatpush.msra.mxu0 %v164
    %240 = vmatpush.msra.mxu0 %v163
    %241 = vmatpush.msra.mxu0 %v162
    %242 = vmatpush.msra.mxu0 %v161
    %243 = vmatpush.msra.mxu0 %v160
    %244 = vmatpush.msra.mxu0 %v159
    %245 = vmatpush.msra.mxu0 %v158
    %246 = vmatmul.f32.gmra.mxu0 %v117
    %v247 = vpop.f32.mrf.mxu0
    %v248 = vadd.f32 %v213, %v247
    %249 = vmatmul.f32.gmra.mxu0 %v120
    %v250 = vpop.f32.mrf.mxu0
    %v251 = vadd.f32 %v214, %v250
    %252 = vmatmul.f32.gmra.mxu0 %v123
    %v253 = vpop.f32.mrf.mxu0
    %v254 = vadd.f32 %v215, %v253
    %255 = vmatmul.f32.gmra.mxu0 %v126
    %v256 = vpop.f32.mrf.mxu0
    %v257 = vadd.f32 %v216, %v256
    %258 = vdwg.mxu0
    %v259 = vadd.f32 %v248, %v226
    %v260 = vadd.f32 %v251, %v227
    %v261 = vadd.f32 %v254, %v228
    %v262 = vadd.f32 %v257, %v229
    %v263 = vld [vmem:[%s2] sm:$0x1]
    %v265 = vperm.slane %v263, 0
    %v267 = vadd.f32 %v259, %v265
    %v268 = vadd.f32 %v260, %v265
    %v269 = vadd.f32 %v261, %v265
    %v270 = vadd.f32 %v262, %v265
    %v271 = vmax.f32 %v267, 0.0
    %v272 = vmax.f32 %v268, 0.0
    %v273 = vmax.f32 %v269, 0.0
    %v274 = vmax.f32 %v270, 0.0
    %v275 = vld [vmem:[%s3] sm:$0xff]
    %v276 = vld [vmem:[%s3 + $0x8] sm:$0xff]
    %v277 = vld [vmem:[%s3 + $0x10] sm:$0xff]
    %v278 = vld [vmem:[%s3 + $0x18] sm:$0xff]
    %v279 = vld [vmem:[%s3 + $0x20] sm:$0xff]
    %v280 = vld [vmem:[%s3 + $0x28] sm:$0xff]
    %v281 = vld [vmem:[%s3 + $0x30] sm:$0xff]
    %v282 = vld [vmem:[%s3 + $0x38] sm:$0xff]
    %v283 = vld [vmem:[%s3 + $0x40] sm:$0xff]
    %v284 = vld [vmem:[%s3 + $0x48] sm:$0xff]
    %v285 = vld [vmem:[%s3 + $0x50] sm:$0xff]
    %v286 = vld [vmem:[%s3 + $0x58] sm:$0xff]
    %v287 = vld [vmem:[%s3 + $0x60] sm:$0xff]
    %v288 = vld [vmem:[%s3 + $0x68] sm:$0xff]
    %v289 = vld [vmem:[%s3 + $0x70] sm:$0xff]
    %v290 = vld [vmem:[%s3 + $0x78] sm:$0xff]
    %291 = vmatpush.msra.mxu0 %v290
    %292 = vmatpush.msra.mxu0 %v289
    %293 = vmatpush.msra.mxu0 %v288
    %294 = vmatpush.msra.mxu0 %v287
    %295 = vmatpush.msra.mxu0 %v286
    %296 = vmatpush.msra.mxu0 %v285
    %297 = vmatpush.msra.mxu0 %v284
    %298 = vmatpush.msra.mxu0 %v283
    %299 = vmatpush.msra.mxu0 %v282
    %300 = vmatpush.msra.mxu0 %v281
    %301 = vmatpush.msra.mxu0 %v280
    %302 = vmatpush.msra.mxu0 %v279
    %303 = vmatpush.msra.mxu0 %v278
    %304 = vmatpush.msra.mxu0 %v277
    %305 = vmatpush.msra.mxu0 %v276
    %306 = vmatpush.msra.mxu0 %v275
    %307 = vmatmul.f32.gmra.mxu0 %v271
    %v308 = vpop.f32.mrf.mxu0
    %v309 = vadd.f32 0.0, %v308
    %310 = vmatmul.f32.gmra.mxu0 %v272
    %v311 = vpop.f32.mrf.mxu0
    %v312 = vadd.f32 0.0, %v311
    %313 = vmatmul.f32.gmra.mxu0 %v273
    %v314 = vpop.f32.mrf.mxu0
    %v315 = vadd.f32 0.0, %v314
    %316 = vmatmul.f32.gmra.mxu0 %v274
    %v317 = vpop.f32.mrf.mxu0
    %v318 = vadd.f32 0.0, %v317
    %319 = vdwg.mxu0
    %s320 = scalar_lea.vmem %s3, 128
    %v321 = vld [vmem:[%s320] sm:$0xff]
    %v322 = vld [vmem:[%s320 + $0x8] sm:$0xff]
    %v323 = vld [vmem:[%s320 + $0x10] sm:$0xff]
    %v324 = vld [vmem:[%s320 + $0x18] sm:$0xff]
    %v325 = vld [vmem:[%s320 + $0x20] sm:$0xff]
    %v326 = vld [vmem:[%s320 + $0x28] sm:$0xff]
    %v327 = vld [vmem:[%s320 + $0x30] sm:$0xff]
    %v328 = vld [vmem:[%s320 + $0x38] sm:$0xff]
    %v329 = vld [vmem:[%s320 + $0x40] sm:$0xff]
    %v330 = vld [vmem:[%s320 + $0x48] sm:$0xff]
    %v331 = vld [vmem:[%s320 + $0x50] sm:$0xff]
    %v332 = vld [vmem:[%s320 + $0x58] sm:$0xff]
    %v333 = vld [vmem:[%s320 + $0x60] sm:$0xff]
    %v334 = vld [vmem:[%s320 + $0x68] sm:$0xff]
    %v335 = vld [vmem:[%s320 + $0x70] sm:$0xff]
    %v336 = vld [vmem:[%s320 + $0x78] sm:$0xff]
    %s337 = scalar_lea.vmem %s3, 256
    %v338 = vld [vmem:[%s337] sm:$0xff]
    %v339 = vld [vmem:[%s337 + $0x8] sm:$0xff]
    %v340 = vld [vmem:[%s337 + $0x10] sm:$0xff]
    %v341 = vld [vmem:[%s337 + $0x18] sm:$0xff]
    %v342 = vld [vmem:[%s337 + $0x20] sm:$0xff]
    %v343 = vld [vmem:[%s337 + $0x28] sm:$0xff]
    %v344 = vld [vmem:[%s337 + $0x30] sm:$0xff]
    %v345 = vld [vmem:[%s337 + $0x38] sm:$0xff]
    %v346 = vld [vmem:[%s337 + $0x40] sm:$0xff]
    %v347 = vld [vmem:[%s337 + $0x48] sm:$0xff]
    %v348 = vld [vmem:[%s337 + $0x50] sm:$0xff]
    %v349 = vld [vmem:[%s337 + $0x58] sm:$0xff]
    %v350 = vld [vmem:[%s337 + $0x60] sm:$0xff]
    %v351 = vld [vmem:[%s337 + $0x68] sm:$0xff]
    %v352 = vld [vmem:[%s337 + $0x70] sm:$0xff]
    %v353 = vld [vmem:[%s337 + $0x78] sm:$0xff]
    %354 = vmatpush.msra.mxu0 %v353
    %355 = vmatpush.msra.mxu0 %v352
    %356 = vmatpush.msra.mxu0 %v351
    %357 = vmatpush.msra.mxu0 %v350
    %358 = vmatpush.msra.mxu0 %v349
    %359 = vmatpush.msra.mxu0 %v348
    %360 = vmatpush.msra.mxu0 %v347
    %361 = vmatpush.msra.mxu0 %v346
    %362 = vmatpush.msra.mxu0 %v345
    %363 = vmatpush.msra.mxu0 %v344
    %364 = vmatpush.msra.mxu0 %v343
    %365 = vmatpush.msra.mxu0 %v342
    %366 = vmatpush.msra.mxu0 %v341
    %367 = vmatpush.msra.mxu0 %v340
    %368 = vmatpush.msra.mxu0 %v339
    %369 = vmatpush.msra.mxu0 %v338
    %370 = vmatmul.f32.gmra.mxu0 %v271
    %v371 = vpop.f32.mrf.mxu0
    %v372 = vadd.f32 0.0, %v371
    %373 = vmatmul.f32.gmra.mxu0 %v272
    %v374 = vpop.f32.mrf.mxu0
    %v375 = vadd.f32 0.0, %v374
    %376 = vmatmul.f32.gmra.mxu0 %v273
    %v377 = vpop.f32.mrf.mxu0
    %v378 = vadd.f32 0.0, %v377
    %379 = vmatmul.f32.gmra.mxu0 %v274
    %v380 = vpop.f32.mrf.mxu0
    %v381 = vadd.f32 0.0, %v380
    %382 = vdwg.mxu0
    %v383 = vrot.slane %v309, 7
    %v384 = vrot.slane %v312, 7
    %v385 = vrot.slane %v315, 7
    %v386 = vrot.slane %v318, 7
    %v387 = vsel %vm208, %v385, %v386
    %v388 = vsel %vm208, %v384, %v385
    %v389 = vsel %vm208, %v383, %v384
    %v390 = vsel %vm208, %v386, %v383
    %v391 = vsel %vm99, 0.0, %v390
    %v392 = vsel %vm100, 0.0, %v389
    %v393 = vsel %vm101, 0.0, %v388
    %v394 = vsel %vm102, 0.0, %v387
    %v395 = vrot.slane %v372, 1
    %v396 = vrot.slane %v375, 1
    %v397 = vrot.slane %v378, 1
    %v398 = vrot.slane %v381, 1
    %v399 = vsel %vm221, %v397, %v398
    %v400 = vsel %vm221, %v396, %v397
    %v401 = vsel %vm221, %v395, %v396
    %v402 = vsel %vm221, %v398, %v395
    %v403 = vsel %vm103, 0.0, %v401
    %v404 = vsel %vm104, 0.0, %v400
    %v405 = vsel %vm105, 0.0, %v399
    %v406 = vsel %vm106, 0.0, %v402
    %407 = vmatpush.msra.mxu0 %v336
    %408 = vmatpush.msra.mxu0 %v335
    %409 = vmatpush.msra.mxu0 %v334
    %410 = vmatpush.msra.mxu0 %v333
    %411 = vmatpush.msra.mxu0 %v332
    %412 = vmatpush.msra.mxu0 %v331
    %413 = vmatpush.msra.mxu0 %v330
    %414 = vmatpush.msra.mxu0 %v329
    %415 = vmatpush.msra.mxu0 %v328
    %416 = vmatpush.msra.mxu0 %v327
    %417 = vmatpush.msra.mxu0 %v326
    %418 = vmatpush.msra.mxu0 %v325
    %419 = vmatpush.msra.mxu0 %v324
    %420 = vmatpush.msra.mxu0 %v323
    %421 = vmatpush.msra.mxu0 %v322
    %422 = vmatpush.msra.mxu0 %v321
    %423 = vmatmul.f32.gmra.mxu0 %v271
    %v424 = vpop.f32.mrf.mxu0
    %v425 = vadd.f32 %v391, %v424
    %426 = vmatmul.f32.gmra.mxu0 %v272
    %v427 = vpop.f32.mrf.mxu0
    %v428 = vadd.f32 %v392, %v427
    %429 = vmatmul.f32.gmra.mxu0 %v273
    %v430 = vpop.f32.mrf.mxu0
    %v431 = vadd.f32 %v393, %v430
    %432 = vmatmul.f32.gmra.mxu0 %v274
    %v433 = vpop.f32.mrf.mxu0
    %v434 = vadd.f32 %v394, %v433
    %435 = vdwg.mxu0
    %v436 = vadd.f32 %v425, %v403
    %v437 = vadd.f32 %v428, %v404
    %v438 = vadd.f32 %v431, %v405
    %v439 = vadd.f32 %v434, %v406
    %v440 = vld [vmem:[%s4] sm:$0x1]
    %v442 = vperm.slane %v440, 0
    %v444 = vadd.f32 %v436, %v442
    %v445 = vadd.f32 %v437, %v442
    %v446 = vadd.f32 %v438, %v442
    %v447 = vadd.f32 %v439, %v442
    %v448 = vld [vmem:[%s5] sm:$0xff]
    %v449 = vld [vmem:[%s5 + $0x8] sm:$0xff]
    %v450 = vld [vmem:[%s5 + $0x10] sm:$0xff]
    %v451 = vld [vmem:[%s5 + $0x18] sm:$0xff]
    %v452 = vld [vmem:[%s5 + $0x20] sm:$0xff]
    %v453 = vld [vmem:[%s5 + $0x28] sm:$0xff]
    %v454 = vld [vmem:[%s5 + $0x30] sm:$0xff]
    %v455 = vld [vmem:[%s5 + $0x38] sm:$0xff]
    %v456 = vld [vmem:[%s6] sm:$0x1]
    %v458 = vperm.slane %v456, 0
    %460 = vmatpush.msra.mxu0 0.0
    %461 = vmatpush.msra.mxu0 0.0
    %462 = vmatpush.msra.mxu0 0.0
    %463 = vmatpush.msra.mxu0 0.0
    %464 = vmatpush.msra.mxu0 0.0
    %465 = vmatpush.msra.mxu0 0.0
    %466 = vmatpush.msra.mxu0 0.0
    %467 = vmatpush.msra.mxu0 0.0
    %468 = vmatpush.msra.mxu0 %v455
    %469 = vmatpush.msra.mxu0 %v454
    %470 = vmatpush.msra.mxu0 %v453
    %471 = vmatpush.msra.mxu0 %v452
    %472 = vmatpush.msra.mxu0 %v451
    %473 = vmatpush.msra.mxu0 %v450
    %474 = vmatpush.msra.mxu0 %v449
    %475 = vmatpush.msra.mxu0 %v448
    %476 = vmatmul.f32.gmra.mxu0 %v117
    %v477 = vpop.f32.mrf.mxu0
    %v478 = vadd.f32 %v458, %v477
    %479 = vmatmul.f32.gmra.mxu0 %v120
    %v480 = vpop.f32.mrf.mxu0
    %v481 = vadd.f32 %v458, %v480
    %482 = vmatmul.f32.gmra.mxu0 %v123
    %v483 = vpop.f32.mrf.mxu0
    %v484 = vadd.f32 %v458, %v483
    %485 = vmatmul.f32.gmra.mxu0 %v126
    %v486 = vpop.f32.mrf.mxu0
    %v487 = vadd.f32 %v458, %v486
    %488 = vdwg.mxu0
    %v489 = vadd.f32 %v444, %v478
    %v490 = vadd.f32 %v445, %v481
    %v491 = vadd.f32 %v446, %v484
    %v492 = vadd.f32 %v447, %v487
    %v493 = vmax.f32 %v489, 0.0
    %v494 = vmax.f32 %v490, 0.0
    %v495 = vmax.f32 %v491, 0.0
    %v496 = vmax.f32 %v492, 0.0
    %497 = vst [vmem:[%s7] sm:$0xff] %v493
    %498 = vst [vmem:[%s7 + $0x8] sm:$0xff] %v494
    %499 = vst [vmem:[%s7 + $0x10] sm:$0xff] %v495
    %500 = vst [vmem:[%s7 + $0x18] sm:$0xff] %v496
    // Predicated region
    $region34: #{residual_block_pallas.1} parent=1 // pred_check
      _
    $region35: #{residual_block_pallas.1} parent=1 // pred_check_branch
      %502 = sbr.rel (0) target = $region37
    $region36: #{residual_block_pallas.1} parent=1 // pred_region
      _
    $region37: #{residual_block_pallas.1} parent=1 // pred_fallthru
      _
    // Predicated region
    $region38: #{residual_block_pallas.1} parent=1 // pred_check
      _
    $region39: #{residual_block_pallas.1} parent=1 // pred_check_branch
      %504 = sbr.rel (0) target = $region41
    $region40: #{residual_block_pallas.1} parent=1 // pred_region
      _
    $region41: #{residual_block_pallas.1} parent=1 // pred_fallthru
      _
    %505 = vsyncpa [#allocation3], 1

</llo_original>
